<compile_context>
chip_gen: v6e
topology: v6e:2x2x1
jax: 0.10.0
libtpu: 0.0.40
codegen_flags: <defaults>
</compile_context>

<pallas_src>
import jax
import jax.numpy as jnp
from jax.experimental import pallas as pl
from jax.experimental.pallas import tpu as pltpu


def _round_up(x, m):
    return (x + m - 1) // m * m


def highway_kernel(x_ref, w_ref, b_ref, o_ref):
    """One row-tile of the whole highway stack.

    x_ref : (TM, Dp)        f32 activation tile
    w_ref : (L, Dp, 2*Dp)   bf16 fused weights [W_T | W_H], stored (in, out)
    b_ref : (L, 1, 2*Dp)    f32 fused biases   [b_T | b_H]
    o_ref : (TM, Dp)        output tile
    """
    Dp = x_ref.shape[1]
    n_layers = w_ref.shape[0]
    x = x_ref[...].astype(jnp.float32)
    # n_layers is small & static -> unrolled Python loop (sequential dependence,
    # keeps the body visible to the LLO scheduler).
    for l in range(n_layers):
        # Single fused MXU matmul producing [t | h]; bf16 inputs, f32 accumulation.
        th = jnp.dot(x.astype(jnp.bfloat16), w_ref[l],
                     preferred_element_type=jnp.float32) + b_ref[l]
        g = jax.nn.sigmoid(th[:, :Dp])        # gate (EUP transcendental), f32
        y = jnp.maximum(th[:, Dp:], 0.0)      # relu(H(x)), f32
        x = x + g * (y - x)                   # gated combine, 3 VPU ops
    o_ref[...] = x.astype(o_ref.dtype)


def highway_forward(x, wt, bt, wh, bh, *, row_tile=512):
    """x: (R, D); wt/wh: (L, D, D) stored as (in, out); bt/bh: (L, 1, D)."""
    R, D = x.shape
    L = wt.shape[0]

    # Lane-dense feature width: pad D up to a multiple of 128.
    Dp = _round_up(D, 128)

    # Fuse T and H into one (Dp, 2*Dp) weight per layer. Zero padding keeps the
    # padded lanes exactly zero through every layer (padded x cols are 0, padded
    # weight rows/cols are 0, padded biases are 0 -> relu(0)=0, x_pad stays 0).
    def pad_w(w):
        return jnp.zeros((L, Dp, Dp), jnp.float32).at[:, :D, :D].set(w)

    def pad_b(b):
        return jnp.zeros((L, 1, Dp), jnp.float32).at[:, :, :D].set(b)

    w_fused = jnp.concatenate([pad_w(wt), pad_w(wh)], axis=-1).astype(jnp.bfloat16)
    b_fused = jnp.concatenate([pad_b(bt), pad_b(bh)], axis=-1)  # f32

    # Row tiling: large tiles for DMA/compute overlap; pad R so TM divides it.
    TM = min(row_tile, _round_up(R, 8))
    Rp = _round_up(R, TM)
    x_p = jnp.zeros((Rp, Dp), x.dtype).at[:R, :D].set(x)

    # VMEM budget: fused weights (worst-case 2 buffers) + in/out tiles
    # (double-buffered) + a few (TM, 2*Dp) f32 temporaries; clamp to a range
    # that is safe on v5e/v6e (128 MiB) and v7x (64 MiB physical).
    w_bytes = 2 * (L * Dp * 2 * Dp * 2) + L * 2 * Dp * 4
    act_bytes = 4 * TM * Dp * 4 + 6 * TM * 2 * Dp * 4
    vmem_limit = int(min(max(2 * (w_bytes + act_bytes), 32 * 2**20), 60 * 2**20))
    # TODO(synk): for very large D on v7x (64 MiB VMEM), add an "arbitrary" grid
    # axis over layers so only one layer's fused weight is resident at a time.

    grid = (Rp // TM,)
    out = pl.pallas_call(
        highway_kernel,
        out_shape=jax.ShapeDtypeStruct((Rp, Dp), x.dtype),
        grid=grid,
        in_specs=[
            pl.BlockSpec((TM, Dp), lambda i: (i, 0)),            # activations: tiled over rows
            pl.BlockSpec((L, Dp, 2 * Dp), lambda i: (0, 0, 0)),  # weights: grid-invariant
            pl.BlockSpec((L, 1, 2 * Dp), lambda i: (0, 0, 0)),   # biases:  grid-invariant
        ],
        out_specs=pl.BlockSpec((TM, Dp), lambda i: (i, 0)),
        compiler_params=pltpu.CompilerParams(
            dimension_semantics=("parallel",),   # rows independent -> megacore on v7x
            vmem_limit_bytes=vmem_limit,
        ),
    )(x_p, w_fused, b_fused)
    return out[:R, :D]


def init_highway_params(key, input_size, n_layers):
    """Matches the PyTorch module's __init__: weights ~ N(0, 1/input_size),
    T bias = -2, H bias = 0. Weights stored as (in, out) (transposed nn.Linear)."""
    kT, kH = jax.random.split(key)
    std = jnp.sqrt(1.0 / input_size)
    wt = std * jax.random.normal(kT, (n_layers, input_size, input_size), jnp.float32)
    wh = std * jax.random.normal(kH, (n_layers, input_size, input_size), jnp.float32)
    bt = jnp.full((n_layers, 1, input_size), -2.0, jnp.float32)
    bh = jnp.zeros((n_layers, 1, input_size), jnp.float32)
    return wt, bt, wh, bh


def highway_reference(x, wt, bt, wh, bh):
    """Pure-JAX reference using the same bf16-input / f32-accumulate matmul
    recipe as the kernel (so the comparison tolerance can stay tight)."""
    xf = x.astype(jnp.float32)
    for l in range(wt.shape[0]):
        xb = xf.astype(jnp.bfloat16)
        g = jax.nn.sigmoid(
            jnp.dot(xb, wt[l].astype(jnp.bfloat16),
                    preferred_element_type=jnp.float32) + bt[l])
        y = jnp.maximum(
            jnp.dot(xb, wh[l].astype(jnp.bfloat16),
                    preferred_element_type=jnp.float32) + bh[l], 0.0)
        xf = xf + g * (y - xf)
    return xf


if __name__ == "__main__":
    input_size = 32   # hidden
    n_layers = 2
    batch, seq = 2, 8

    key = jax.random.PRNGKey(0)
    kx, kp = jax.random.split(key)

    # x : (batch, seq, hidden) -> flatten rows for the kernel
    x3 = jax.random.normal(kx, (batch, seq, input_size), jnp.float32)
    x = x3.reshape(batch * seq, input_size)

    wt, bt, wh, bh = init_highway_params(kp, input_size, n_layers)

    out = highway_forward(x, wt, bt, wh, bh)
    out = jax.block_until_ready(out)

    ref = highway_reference(x, wt, bt, wh, bh)
    assert out.shape == (batch * seq, input_size)
    max_diff = float(jnp.max(jnp.abs(out - ref)))
    assert jnp.allclose(out, ref, atol=1e-3, rtol=1e-3), f"mismatch vs ref (max {max_diff})"

    # reshape back to (batch, seq, hidden) if the caller needs 3-D output
    _ = out.reshape(batch, seq, input_size)

    print("KERNEL_OK")
</pallas_src>

<mosaic_0001>
module attributes {stable_mosaic.version = 11 : i64} {
  func.func @highway_kernel(%arg0: i32, %arg1: memref<16x128xf32, #tpu.memory_space<vmem>>, %arg2: memref<2x128x256xbf16, #tpu.memory_space<vmem>>, %arg3: memref<2x1x256xf32, #tpu.memory_space<vmem>>, %arg4: memref<16x128xf32, #tpu.memory_space<vmem>>) attributes {dimension_semantics = [#tpu.dimension_semantics<parallel>], iteration_bounds = array<i64: 1>, scalar_prefetch = 0 : i64, scratch_operands = 0 : i64, tpu.core_type = #tpu.core_type<tc>, window_params = [{transform_indices = @transform_0, window_bounds = array<i64: 16, 128>}, {pipeline_mode = #tpu.pipeline_mode<synchronous>, transform_indices = @transform_1, window_bounds = array<i64: 2, 128, 256>}, {pipeline_mode = #tpu.pipeline_mode<synchronous>, transform_indices = @transform_2, window_bounds = array<i64: 2, 1, 256>}, {transform_indices = @transform_3, window_bounds = array<i64: 16, 128>}]} {
    %c0 = arith.constant 0 : index
    %c0_0 = arith.constant 0 : index
    %0 = vector.load %arg1[%c0, %c0_0] : memref<16x128xf32, #tpu.memory_space<vmem>>, vector<16x128xf32>
    %1 = arith.truncf %0 : vector<16x128xf32> to vector<16x128xbf16>
    %c0_1 = arith.constant 0 : index
    %c0_2 = arith.constant 0 : index
    %c0_3 = arith.constant 0 : index
    %2 = vector.load %arg2[%c0_1, %c0_2, %c0_3] : memref<2x128x256xbf16, #tpu.memory_space<vmem>>, vector<1x128x256xbf16>
    %3 = vector.shape_cast %2 : vector<1x128x256xbf16> to vector<128x256xbf16>
    %cst = arith.constant dense<0.000000e+00> : vector<16x256xf32>
    %4 = tpu.matmul %1, %3, %cst {dimension_numbers = #tpu.dot_dimension_numbers<[1], [0], [0], [1], [0, 0, 1, 1], [], []>} : vector<16x128xbf16>, vector<128x256xbf16>, vector<16x256xf32> -> vector<16x256xf32>
    %c0_4 = arith.constant 0 : index
    %c0_5 = arith.constant 0 : index
    %c0_6 = arith.constant 0 : index
    %5 = vector.load %arg3[%c0_4, %c0_5, %c0_6] : memref<2x1x256xf32, #tpu.memory_space<vmem>>, vector<1x1x256xf32>
    %6 = vector.shape_cast %5 : vector<1x1x256xf32> to vector<1x256xf32>
    %7 = vector.broadcast %6 : vector<1x256xf32> to vector<16x256xf32>
    %8 = arith.addf %4, %7 : vector<16x256xf32>
    %9 = vector.extract_strided_slice %8 {offsets = [0, 0], sizes = [16, 128], strides = [1, 1]} : vector<16x256xf32> to vector<16x128xf32>
    %10 = arith.negf %9 : vector<16x128xf32>
    %11 = math.exp %10 : vector<16x128xf32>
    %cst_7 = arith.constant 1.000000e+00 : f32
    %12 = vector.broadcast %cst_7 : f32 to vector<16x128xf32>
    %13 = arith.addf %12, %11 : vector<16x128xf32>
    %14 = arith.divf %12, %13 : vector<16x128xf32>
    %15 = vector.extract_strided_slice %8 {offsets = [0, 128], sizes = [16, 128], strides = [1, 1]} : vector<16x256xf32> to vector<16x128xf32>
    %cst_8 = arith.constant 0.000000e+00 : f32
    %16 = vector.broadcast %cst_8 : f32 to vector<16x128xf32>
    %17 = arith.maximumf %15, %16 : vector<16x128xf32>
    %18 = arith.subf %17, %0 : vector<16x128xf32>
    %19 = arith.mulf %14, %18 : vector<16x128xf32>
    %20 = arith.addf %0, %19 : vector<16x128xf32>
    %21 = arith.truncf %20 : vector<16x128xf32> to vector<16x128xbf16>
    %c1 = arith.constant 1 : index
    %c0_9 = arith.constant 0 : index
    %c0_10 = arith.constant 0 : index
    %22 = vector.load %arg2[%c1, %c0_9, %c0_10] : memref<2x128x256xbf16, #tpu.memory_space<vmem>>, vector<1x128x256xbf16>
    %23 = vector.shape_cast %22 : vector<1x128x256xbf16> to vector<128x256xbf16>
    %cst_11 = arith.constant dense<0.000000e+00> : vector<16x256xf32>
    %24 = tpu.matmul %21, %23, %cst_11 {dimension_numbers = #tpu.dot_dimension_numbers<[1], [0], [0], [1], [0, 0, 1, 1], [], []>} : vector<16x128xbf16>, vector<128x256xbf16>, vector<16x256xf32> -> vector<16x256xf32>
    %c1_12 = arith.constant 1 : index
    %c0_13 = arith.constant 0 : index
    %c0_14 = arith.constant 0 : index
    %25 = vector.load %arg3[%c1_12, %c0_13, %c0_14] : memref<2x1x256xf32, #tpu.memory_space<vmem>>, vector<1x1x256xf32>
    %26 = vector.shape_cast %25 : vector<1x1x256xf32> to vector<1x256xf32>
    %27 = vector.broadcast %26 : vector<1x256xf32> to vector<16x256xf32>
    %28 = arith.addf %24, %27 : vector<16x256xf32>
    %29 = vector.extract_strided_slice %28 {offsets = [0, 0], sizes = [16, 128], strides = [1, 1]} : vector<16x256xf32> to vector<16x128xf32>
    %30 = arith.negf %29 : vector<16x128xf32>
    %31 = math.exp %30 : vector<16x128xf32>
    %cst_15 = arith.constant 1.000000e+00 : f32
    %32 = vector.broadcast %cst_15 : f32 to vector<16x128xf32>
    %33 = arith.addf %32, %31 : vector<16x128xf32>
    %34 = arith.divf %32, %33 : vector<16x128xf32>
    %35 = vector.extract_strided_slice %28 {offsets = [0, 128], sizes = [16, 128], strides = [1, 1]} : vector<16x256xf32> to vector<16x128xf32>
    %cst_16 = arith.constant 0.000000e+00 : f32
    %36 = vector.broadcast %cst_16 : f32 to vector<16x128xf32>
    %37 = arith.maximumf %35, %36 : vector<16x128xf32>
    %38 = arith.subf %37, %20 : vector<16x128xf32>
    %39 = arith.mulf %34, %38 : vector<16x128xf32>
    %40 = arith.addf %20, %39 : vector<16x128xf32>
    %c0_17 = arith.constant 0 : index
    %c0_18 = arith.constant 0 : index
    %41 = vector.load %arg4[%c0_17, %c0_18] : memref<16x128xf32, #tpu.memory_space<vmem>>, vector<16x128xf32>
    tpu.vector_store %arg4[%c0_17, %c0_18], %40 {strides = array<i32>} : memref<16x128xf32, #tpu.memory_space<vmem>>, vector<16x128xf32>,
    return
  }
  func.func @transform_0(%arg0: i32) -> (i32, i32) {
    %c0_i32 = arith.constant 0 : i32
    %c0_i32_0 = arith.constant 0 : i32
    return %arg0, %c0_i32 : i32, i32
  }
  func.func @transform_1(%arg0: i32) -> (i32, i32, i32) {
    %c0_i32 = arith.constant 0 : i32
    %c0_i32_0 = arith.constant 0 : i32
    %c0_i32_1 = arith.constant 0 : i32
    %c0_i32_2 = arith.constant 0 : i32
    return %c0_i32, %c0_i32_0, %c0_i32_1 : i32, i32, i32
  }
  func.func @transform_2(%arg0: i32) -> (i32, i32, i32) {
    %c0_i32 = arith.constant 0 : i32
    %c0_i32_0 = arith.constant 0 : i32
    %c0_i32_1 = arith.constant 0 : i32
    %c0_i32_2 = arith.constant 0 : i32
    return %c0_i32, %c0_i32_0, %c0_i32_1 : i32, i32, i32
  }
  func.func @transform_3(%arg0: i32) -> (i32, i32) {
    %c0_i32 = arith.constant 0 : i32
    %c0_i32_0 = arith.constant 0 : i32
    return %arg0, %c0_i32 : i32, i32
  }
}

</mosaic_0001>

<llo_original>
// kernel: tpu_custom_call.1
$region0: #{tpu_custom_call.1}
  #allocation0 [shape = 'u32[]', space=smem, size = 0x4, offset = 0x4, fixed_abs, tag = 'smem constant byte address 0x4 - core index']
  #allocation1 [shape = 'u32[144,128]{1,0:T(1,128)}', space=vmem, size = 0x12000, scoped, tag = 'internal scratch']
  %s0 = inlined_call_operand.hbm [shape: f32[16,128], index: 0, kind: input, shape index: {}]
  %s1 = inlined_call_operand.hbm [shape: bf16[2,128,256], index: 1, kind: input, shape index: {}]
  %s2 = inlined_call_operand.hbm [shape: f32[2,1,256], index: 2, kind: input, shape index: {}]
  %s3 = inlined_call_operand.hbm [shape: f32[16,128], index: 3, kind: output, shape index: {}]
  %s4 = sld [smem:[#allocation0]]
  $region34: #{tpu_custom_call.1} parent=0
    _
  %s6 = ssub.s32 1, %s4
  %s7 = scalar_select 0, %s6, %s4
  $region1: #{tpu_custom_call.1} parent=0
    #allocation2 [shape = 'u8[8192]{0}', space=vmem, size = 0x2000, scoped, tag = 'input window, operand 0, single buffered']
    #allocation3 [shape = 's32[1]{0}', space=sflag, size = 0x4, scoped, tag = 'scoped memory for tpu_custom_call.1']
    #allocation4 [shape = 's32[1]{0}', space=sflag, size = 0x4, scoped, tag = 'scoped memory for tpu_custom_call.1']
    #allocation5 [shape = 'u8[131072]{0}', space=vmem, size = 0x20000, scoped, tag = 'input window, operand 1, single buffered']
    #allocation6 [shape = 's32[1]{0}', space=sflag, size = 0x4, scoped, tag = 'scoped memory for tpu_custom_call.1']
    #allocation7 [shape = 'u8[2048]{0}', space=vmem, size = 0x800, scoped, tag = 'input window, operand 2, single buffered']
    #allocation8 [shape = 'u8[8192]{0}', space=vmem, size = 0x2000, scoped, tag = 'output window, operand 0, single buffered']
    %8 = vsyncpa [#allocation3], 0
    %9 = vsyncpa [#allocation6], 0
    %10 = vsyncpa [#allocation4], 0
    // Predicated region
    $region2: #{tpu_custom_call.1} parent=1 // pred_check
      _
    $region3: #{tpu_custom_call.1} parent=1 // pred_check_branch
      %12 = sbr.rel (0) target = $region5
    $region4: #{tpu_custom_call.1} parent=1 // pred_region
      %s14 = ssub.s32 256, 256
      %15 = vsyncadd [#allocation3], %s14
      %s16 = sshll.u32 [#allocation2], 4
      %s17 = int_to_ptr.vmem [resolvable:$true] %s16
      %22 = dma.hbm_to_vmem [thread:$0]  %s0, 256, %s17, [#allocation3], 128, 128, 8
    $region5: #{tpu_custom_call.1} parent=1 // pred_fallthru
      _
    // Predicated region
    $region6: #{tpu_custom_call.1} parent=1 // pred_check
      _
    $region7: #{tpu_custom_call.1} parent=1 // pred_check_branch
      %24 = sbr.rel (0) target = $region9
    $region8: #{tpu_custom_call.1} parent=1 // pred_region
      %s26 = ssub.s32 4096, 4096
      %27 = vsyncadd [#allocation6], %s26
      %s28 = sshll.u32 [#allocation5], 4
      %s29 = int_to_ptr.vmem [resolvable:$true] %s28
      %34 = dma.hbm_to_vmem [thread:$0]  %s1, 4096, %s29, [#allocation6], 128, 128, 8
    $region9: #{tpu_custom_call.1} parent=1 // pred_fallthru
      _
    // Predicated region
    $region10: #{tpu_custom_call.1} parent=1 // pred_check
      _
    $region11: #{tpu_custom_call.1} parent=1 // pred_check_branch
      %36 = sbr.rel (0) target = $region13
    $region12: #{tpu_custom_call.1} parent=1 // pred_region
      %s38 = ssub.s32 64, 64
      %39 = vsyncadd [#allocation6], %s38
      %s40 = sshll.u32 [#allocation7], 4
      %s41 = int_to_ptr.vmem [resolvable:$true] %s40
      %46 = dma.hbm_to_vmem [thread:$0]  %s2, 64, %s41, [#allocation6], 32, 32, 2
    $region13: #{tpu_custom_call.1} parent=1 // pred_fallthru
      _
    // Predicated region
    $region14: #{tpu_custom_call.1} parent=1 // pred_check
      _
    $region15: #{tpu_custom_call.1} parent=1 // pred_check_branch
      %48 = sbr.rel (0) target = $region17
    $region16: #{tpu_custom_call.1} parent=1 // pred_region
      %49 = dma.done [#allocation3], 256
    $region17: #{tpu_custom_call.1} parent=1 // pred_fallthru
      _
    // Predicated region
    $region18: #{tpu_custom_call.1} parent=1 // pred_check
      _
    $region19: #{tpu_custom_call.1} parent=1 // pred_check_branch
      %51 = sbr.rel (0) target = $region21
    $region20: #{tpu_custom_call.1} parent=1 // pred_region
      %52 = dma.done [#allocation6], 4096
    $region21: #{tpu_custom_call.1} parent=1 // pred_fallthru
      _
    // Predicated region
    $region22: #{tpu_custom_call.1} parent=1 // pred_check
      _
    $region23: #{tpu_custom_call.1} parent=1 // pred_check_branch
      %54 = sbr.rel (0) target = $region25
    $region24: #{tpu_custom_call.1} parent=1 // pred_region
      %55 = dma.done [#allocation6], 64
    $region25: #{tpu_custom_call.1} parent=1 // pred_fallthru
      _
    %v57 = vld [vmem:[#allocation2] sm:$0xff]
    %v58 = vld [vmem:[#allocation2 + $0x8] sm:$0xff]
    %v59 = vpack.c.bf16 %v58, %v57
    %v60 = vld [vmem:[#allocation5] sm:$0xff]
    %v61 = vld [vmem:[#allocation5 + $0x8] sm:$0xff]
    %v62 = vld [vmem:[#allocation5 + $0x10] sm:$0xff]
    %v63 = vld [vmem:[#allocation5 + $0x18] sm:$0xff]
    %v64 = vld [vmem:[#allocation5 + $0x20] sm:$0xff]
    %v65 = vld [vmem:[#allocation5 + $0x28] sm:$0xff]
    %v66 = vld [vmem:[#allocation5 + $0x30] sm:$0xff]
    %v67 = vld [vmem:[#allocation5 + $0x38] sm:$0xff]
    %v68 = vld [vmem:[#allocation5 + $0x40] sm:$0xff]
    %v69 = vld [vmem:[#allocation5 + $0x48] sm:$0xff]
    %v70 = vld [vmem:[#allocation5 + $0x50] sm:$0xff]
    %v71 = vld [vmem:[#allocation5 + $0x58] sm:$0xff]
    %v72 = vld [vmem:[#allocation5 + $0x60] sm:$0xff]
    %v73 = vld [vmem:[#allocation5 + $0x68] sm:$0xff]
    %v74 = vld [vmem:[#allocation5 + $0x70] sm:$0xff]
    %v75 = vld [vmem:[#allocation5 + $0x78] sm:$0xff]
    %v76 = vld [vmem:[#allocation7] sm:$0x3]
    %v78 = vlaneseq
    %v79 = vshrl.u32 %v78, 7
    %v80 = vsub.s32 0, %v79
    %v81 = vrot.slane %v76, %v80
    %v82 = vlaneseq
    %v83 = vshrl.u32 %v82, 7
    %v84 = vsub.s32 1, %v83
    %v85 = vrot.slane %v76, %v84
    %v104 = vunpack.c.l.b16 %v60
    %v105 = vunpack.c.h.b16 %v60
    %v106 = vunpack.c.l.b16 %v61
    %v107 = vunpack.c.h.b16 %v61
    %v108 = vunpack.c.l.b16 %v62
    %v109 = vunpack.c.h.b16 %v62
    %v110 = vunpack.c.l.b16 %v63
    %v111 = vunpack.c.h.b16 %v63
    %v112 = vunpack.c.l.b16 %v64
    %v113 = vunpack.c.h.b16 %v64
    %v114 = vunpack.c.l.b16 %v65
    %v115 = vunpack.c.h.b16 %v65
    %v116 = vunpack.c.l.b16 %v66
    %v117 = vunpack.c.h.b16 %v66
    %v118 = vunpack.c.l.b16 %v67
    %v119 = vunpack.c.h.b16 %v67
    %v120 = vunpack.c.l.b16 %v68
    %v121 = vunpack.c.h.b16 %v68
    %v122 = vunpack.c.l.b16 %v69
    %v123 = vunpack.c.h.b16 %v69
    %v124 = vunpack.c.l.b16 %v70
    %v125 = vunpack.c.h.b16 %v70
    %v126 = vunpack.c.l.b16 %v71
    %v127 = vunpack.c.h.b16 %v71
    %v128 = vunpack.c.l.b16 %v72
    %v129 = vunpack.c.h.b16 %v72
    %v130 = vunpack.c.l.b16 %v73
    %v131 = vunpack.c.h.b16 %v73
    %v132 = vunpack.c.l.b16 %v74
    %v133 = vunpack.c.h.b16 %v74
    %v134 = vunpack.c.l.b16 %v75
    %v135 = vunpack.c.h.b16 %v75
    %v136 = vpack.c.b16 %v106, %v104
    %v137 = vpack.c.b16 %v107, %v105
    %v138 = vpack.c.b16 %v110, %v108
    %v139 = vpack.c.b16 %v111, %v109
    %v140 = vpack.c.b16 %v114, %v112
    %v141 = vpack.c.b16 %v115, %v113
    %v142 = vpack.c.b16 %v118, %v116
    %v143 = vpack.c.b16 %v119, %v117
    %v144 = vpack.c.b16 %v122, %v120
    %v145 = vpack.c.b16 %v123, %v121
    %v146 = vpack.c.b16 %v126, %v124
    %v147 = vpack.c.b16 %v127, %v125
    %v148 = vpack.c.b16 %v130, %v128
    %v149 = vpack.c.b16 %v131, %v129
    %v150 = vpack.c.b16 %v134, %v132
    %v151 = vpack.c.b16 %v135, %v133
    %168 = vmatprep.subr.bf16.mxu0 %v151
    %169 = vmatpush1.bf16.msra.mxu0 %v150
    %170 = vmatprep.subr.bf16.mxu0 %v149
    %171 = vmatpush1.bf16.msra.mxu0 %v148
    %172 = vmatprep.subr.bf16.mxu0 %v147
    %173 = vmatpush1.bf16.msra.mxu0 %v146
    %174 = vmatprep.subr.bf16.mxu0 %v145
    %175 = vmatpush1.bf16.msra.mxu0 %v144
    %176 = vmatprep.subr.bf16.mxu0 %v143
    %177 = vmatpush1.bf16.msra.mxu0 %v142
    %178 = vmatprep.subr.bf16.mxu0 %v141
    %179 = vmatpush1.bf16.msra.mxu0 %v140
    %180 = vmatprep.subr.bf16.mxu0 %v139
    %181 = vmatpush1.bf16.msra.mxu0 %v138
    %182 = vmatprep.subr.bf16.mxu0 %v137
    %183 = vmatpush1.bf16.msra.mxu0 %v136
    %184 = vmatprep.subr.bf16.mxu0 0
    %185 = vmatpush2.bf16.msra.mxu0 0
    %186 = vmatprep.subr.bf16.mxu0 0
    %187 = vmatpush2.bf16.msra.mxu0 0
    %188 = vmatprep.subr.bf16.mxu0 0
    %189 = vmatpush2.bf16.msra.mxu0 0
    %190 = vmatprep.subr.bf16.mxu0 0
    %191 = vmatpush2.bf16.msra.mxu0 0
    %192 = vmatprep.subr.bf16.mxu0 0
    %193 = vmatpush2.bf16.msra.mxu0 0
    %194 = vmatprep.subr.bf16.mxu0 0
    %195 = vmatpush2.bf16.msra.mxu0 0
    %196 = vmatprep.subr.bf16.mxu0 0
    %197 = vmatpush2.bf16.msra.mxu0 0
    %198 = vmatprep.subr.bf16.mxu0 0
    %199 = vmatpush2.bf16.msra.mxu0 0
    %200 = vmatprep.mubr.bf16.mxu0 0
    %201 = vmatmul.mubr.bf16.gmra.mxu0 %v59
    %v202 = vpop.f32.mrf.mxu0
    %v203 = vadd.f32 %v81, %v202
    %v204 = vpop.f32.mrf.mxu0
    %v205 = vadd.f32 %v85, %v204
    %v206 = vpop.f32.mrf.mxu0
    %v207 = vadd.f32 %v81, %v206
    %v208 = vpop.f32.mrf.mxu0
    %v209 = vadd.f32 %v85, %v208
    %210 = vdwg.mxu0
    %v211 = vxor.u32 %v203, 2147483648
    %v212 = vxor.u32 %v207, 2147483648
    %v213 = vmul.f32 %v211, 1.442695
    %v214 = vpow.pop %v213
    %v215 = vmul.f32 %v212, 1.442695
    %v216 = vpow.pop %v215
    %v217 = vadd.f32 %v214, 1.0
    %v218 = vadd.f32 %v216, 1.0
    %v219 = vrcp.pop %v217
    %v220 = vmul.f32 1.0, %v219
    %v221 = vrcp.pop %v218
    %v222 = vmul.f32 1.0, %v221
    %v223 = vmax.f32 %v205, 0.0
    %v224 = vmax.f32 %v209, 0.0
    %v225 = vsub.f32 %v223, %v57
    %v226 = vsub.f32 %v224, %v58
    %v227 = vmul.f32 %v220, %v225
    %v228 = vmul.f32 %v222, %v226
    %v229 = vadd.f32 %v57, %v227
    %v230 = vadd.f32 %v58, %v228
    %v231 = vpack.c.bf16 %v230, %v229
    %s232 = scalar_lea.vmem [#allocation5], 128
    %v233 = vld [vmem:[%s232] sm:$0xff]
    %v234 = vld [vmem:[%s232 + $0x8] sm:$0xff]
    %v235 = vld [vmem:[%s232 + $0x10] sm:$0xff]
    %v236 = vld [vmem:[%s232 + $0x18] sm:$0xff]
    %v237 = vld [vmem:[%s232 + $0x20] sm:$0xff]
    %v238 = vld [vmem:[%s232 + $0x28] sm:$0xff]
    %v239 = vld [vmem:[%s232 + $0x30] sm:$0xff]
    %v240 = vld [vmem:[%s232 + $0x38] sm:$0xff]
    %v241 = vld [vmem:[%s232 + $0x40] sm:$0xff]
    %v242 = vld [vmem:[%s232 + $0x48] sm:$0xff]
    %v243 = vld [vmem:[%s232 + $0x50] sm:$0xff]
    %v244 = vld [vmem:[%s232 + $0x58] sm:$0xff]
    %v245 = vld [vmem:[%s232 + $0x60] sm:$0xff]
    %v246 = vld [vmem:[%s232 + $0x68] sm:$0xff]
    %v247 = vld [vmem:[%s232 + $0x70] sm:$0xff]
    %v248 = vld [vmem:[%s232 + $0x78] sm:$0xff]
    %s249 = scalar_lea.vmem [#allocation7], 2
    %v250 = vld [vmem:[%s249] sm:$0x3]
    %v252 = vlaneseq
    %v253 = vshrl.u32 %v252, 7
    %v254 = vsub.s32 0, %v253
    %v255 = vrot.slane %v250, %v254
    %v256 = vlaneseq
    %v257 = vshrl.u32 %v256, 7
    %v258 = vsub.s32 1, %v257
    %v259 = vrot.slane %v250, %v258
    %v278 = vunpack.c.l.b16 %v233
    %v279 = vunpack.c.h.b16 %v233
    %v280 = vunpack.c.l.b16 %v234
    %v281 = vunpack.c.h.b16 %v234
    %v282 = vunpack.c.l.b16 %v235
    %v283 = vunpack.c.h.b16 %v235
    %v284 = vunpack.c.l.b16 %v236
    %v285 = vunpack.c.h.b16 %v236
    %v286 = vunpack.c.l.b16 %v237
    %v287 = vunpack.c.h.b16 %v237
    %v288 = vunpack.c.l.b16 %v238
    %v289 = vunpack.c.h.b16 %v238
    %v290 = vunpack.c.l.b16 %v239
    %v291 = vunpack.c.h.b16 %v239
    %v292 = vunpack.c.l.b16 %v240
    %v293 = vunpack.c.h.b16 %v240
    %v294 = vunpack.c.l.b16 %v241
    %v295 = vunpack.c.h.b16 %v241
    %v296 = vunpack.c.l.b16 %v242
    %v297 = vunpack.c.h.b16 %v242
    %v298 = vunpack.c.l.b16 %v243
    %v299 = vunpack.c.h.b16 %v243
    %v300 = vunpack.c.l.b16 %v244
    %v301 = vunpack.c.h.b16 %v244
    %v302 = vunpack.c.l.b16 %v245
    %v303 = vunpack.c.h.b16 %v245
    %v304 = vunpack.c.l.b16 %v246
    %v305 = vunpack.c.h.b16 %v246
    %v306 = vunpack.c.l.b16 %v247
    %v307 = vunpack.c.h.b16 %v247
    %v308 = vunpack.c.l.b16 %v248
    %v309 = vunpack.c.h.b16 %v248
    %v310 = vpack.c.b16 %v280, %v278
    %v311 = vpack.c.b16 %v281, %v279
    %v312 = vpack.c.b16 %v284, %v282
    %v313 = vpack.c.b16 %v285, %v283
    %v314 = vpack.c.b16 %v288, %v286
    %v315 = vpack.c.b16 %v289, %v287
    %v316 = vpack.c.b16 %v292, %v290
    %v317 = vpack.c.b16 %v293, %v291
    %v318 = vpack.c.b16 %v296, %v294
    %v319 = vpack.c.b16 %v297, %v295
    %v320 = vpack.c.b16 %v300, %v298
    %v321 = vpack.c.b16 %v301, %v299
    %v322 = vpack.c.b16 %v304, %v302
    %v323 = vpack.c.b16 %v305, %v303
    %v324 = vpack.c.b16 %v308, %v306
    %v325 = vpack.c.b16 %v309, %v307
    %342 = vmatprep.subr.bf16.mxu0 %v325
    %343 = vmatpush1.bf16.msra.mxu0 %v324
    %344 = vmatprep.subr.bf16.mxu0 %v323
    %345 = vmatpush1.bf16.msra.mxu0 %v322
    %346 = vmatprep.subr.bf16.mxu0 %v321
    %347 = vmatpush1.bf16.msra.mxu0 %v320
    %348 = vmatprep.subr.bf16.mxu0 %v319
    %349 = vmatpush1.bf16.msra.mxu0 %v318
    %350 = vmatprep.subr.bf16.mxu0 %v317
    %351 = vmatpush1.bf16.msra.mxu0 %v316
    %352 = vmatprep.subr.bf16.mxu0 %v315
    %353 = vmatpush1.bf16.msra.mxu0 %v314
    %354 = vmatprep.subr.bf16.mxu0 %v313
    %355 = vmatpush1.bf16.msra.mxu0 %v312
    %356 = vmatprep.subr.bf16.mxu0 %v311
    %357 = vmatpush1.bf16.msra.mxu0 %v310
    %358 = vmatprep.subr.bf16.mxu0 0
    %359 = vmatpush2.bf16.msra.mxu0 0
    %360 = vmatprep.subr.bf16.mxu0 0
    %361 = vmatpush2.bf16.msra.mxu0 0
    %362 = vmatprep.subr.bf16.mxu0 0
    %363 = vmatpush2.bf16.msra.mxu0 0
    %364 = vmatprep.subr.bf16.mxu0 0
    %365 = vmatpush2.bf16.msra.mxu0 0
    %366 = vmatprep.subr.bf16.mxu0 0
    %367 = vmatpush2.bf16.msra.mxu0 0
    %368 = vmatprep.subr.bf16.mxu0 0
    %369 = vmatpush2.bf16.msra.mxu0 0
    %370 = vmatprep.subr.bf16.mxu0 0
    %371 = vmatpush2.bf16.msra.mxu0 0
    %372 = vmatprep.subr.bf16.mxu0 0
    %373 = vmatpush2.bf16.msra.mxu0 0
    %374 = vmatprep.mubr.bf16.mxu0 0
    %375 = vmatmul.mubr.bf16.gmra.mxu0 %v231
    %v376 = vpop.f32.mrf.mxu0
    %v377 = vadd.f32 %v255, %v376
    %v378 = vpop.f32.mrf.mxu0
    %v379 = vadd.f32 %v259, %v378
    %v380 = vpop.f32.mrf.mxu0
    %v381 = vadd.f32 %v255, %v380
    %v382 = vpop.f32.mrf.mxu0
    %v383 = vadd.f32 %v259, %v382
    %384 = vdwg.mxu0
    %v385 = vxor.u32 %v377, 2147483648
    %v386 = vxor.u32 %v381, 2147483648
    %v387 = vmul.f32 %v385, 1.442695
    %v388 = vpow.pop %v387
    %v389 = vmul.f32 %v386, 1.442695
    %v390 = vpow.pop %v389
    %v391 = vadd.f32 %v388, 1.0
    %v392 = vadd.f32 %v390, 1.0
    %v393 = vrcp.pop %v391
    %v394 = vmul.f32 1.0, %v393
    %v395 = vrcp.pop %v392
    %v396 = vmul.f32 1.0, %v395
    %v397 = vmax.f32 %v379, 0.0
    %v398 = vmax.f32 %v383, 0.0
    %v399 = vsub.f32 %v397, %v229
    %v400 = vsub.f32 %v398, %v230
    %v401 = vmul.f32 %v394, %v399
    %v402 = vmul.f32 %v396, %v400
    %v403 = vadd.f32 %v229, %v401
    %v404 = vadd.f32 %v230, %v402
    %405 = vst [vmem:[#allocation8] sm:$0xff] %v403
    %406 = vst [vmem:[#allocation8 + $0x8] sm:$0xff] %v404
    // Predicated region
    $region26: #{tpu_custom_call.1} parent=1 // pred_check
      _
    $region27: #{tpu_custom_call.1} parent=1 // pred_check_branch
      %408 = sbr.rel (0) target = $region29
    $region28: #{tpu_custom_call.1} parent=1 // pred_region
      %s410 = ssub.s32 256, 256
      %411 = vsyncadd [#allocation4], %s410
      %s412 = sshll.u32 [#allocation8], 4
      %s413 = int_to_ptr.vmem [resolvable:$true] %s412
      %418 = dma.vmem_to_hbm [thread:$0]  %s413, 256, %s3, [#allocation4], 128, 128, 8
    $region29: #{tpu_custom_call.1} parent=1 // pred_fallthru
      _
    // Predicated region
    $region30: #{tpu_custom_call.1} parent=1 // pred_check
      _
    $region31: #{tpu_custom_call.1} parent=1 // pred_check_branch
      %420 = sbr.rel (0) target = $region33
    $region32: #{tpu_custom_call.1} parent=1 // pred_region
      %421 = dma.done [#allocation4], 256
    $region33: #{tpu_custom_call.1} parent=1 // pred_fallthru
      _
    %422 = vsyncpa [#allocation3], 1
    %423 = vsyncpa [#allocation6], 1
    %424 = vsyncpa [#allocation4], 1

</llo_original>
